<compile_context>
chip_gen: v6e
topology: v6e:2x2x1
jax: 0.10.0
libtpu: 0.0.40
codegen_flags: <defaults>
</compile_context>

<pallas_src>
import functools

import jax
import jax.numpy as jnp
from jax.experimental import pallas as pl
from jax.experimental.pallas import tpu as pltpu


def _cosine_linear_kernel(x_ref, w_ref, o_ref, acc_ref, xsq_ref, wsq_ref,
                          *, hoist_xsq: bool, bf16_matmul: bool):
    j = pl.program_id(1)
    k = pl.program_id(2)
    nk = pl.num_programs(2)

    @pl.when(k == 0)
    def _init():
        acc_ref[...] = jnp.zeros_like(acc_ref)
        wsq_ref[...] = jnp.zeros_like(wsq_ref)

    if hoist_xsq:
        # xsq is only (re)built on the first j tile; it persists across j.
        @pl.when((j == 0) & (k == 0))
        def _init_xsq():
            xsq_ref[...] = jnp.zeros_like(xsq_ref)
    else:
        @pl.when(k == 0)
        def _init_xsq():
            xsq_ref[...] = jnp.zeros_like(xsq_ref)

    x = x_ref[...]          # (TM, TK), input dtype
    w = w_ref[...]          # (TK, TN)

    # ---- MXU: raw matmul, f32 accumulation.  bf16 operands when inputs are
    # f32 (MXU has no f32 mode; bf16 is ~3x fewer vmatmul passes).
    if bf16_matmul and x.dtype == jnp.float32:
        xm = x.astype(jnp.bfloat16)
        wm = w.astype(jnp.bfloat16)
    else:
        xm, wm = x, w
    acc_ref[...] += jnp.dot(xm, wm, preferred_element_type=jnp.float32)

    # ---- Row / column sum-of-squares, accumulated across K in f32 from the
    # original (un-rounded) tiles.
    wf = w.astype(jnp.float32)
    wsq_ref[...] += jnp.sum(wf * wf, axis=0, keepdims=True)   # (1, TN)

    def _acc_xsq():
        xf = x.astype(jnp.float32)
        xsq_ref[...] += jnp.sum(xf * xf, axis=1, keepdims=True)  # (TM, 1)

    if hoist_xsq:
        pl.when(j == 0)(_acc_xsq)
    else:
        _acc_xsq()

    # ---- Epilogue on the last K step: normalize, clamp, rescale by xlen.
    @pl.when(k == nk - 1)
    def _finalize():
        xsq = xsq_ref[...]
        wsq = wsq_ref[...]
        inv_xlen = jax.lax.rsqrt(xsq)          # EUP slot, not VALU
        inv_wlen = jax.lax.rsqrt(wsq)          # EUP slot
        xlen = xsq * inv_xlen                  # == sqrt(xsq), saves an EUP sqrt
        cos = acc_ref[...] * inv_xlen * inv_wlen
        cos = jnp.clip(cos, -1.0, 1.0)
        o_ref[...] = (cos * xlen).astype(o_ref.dtype)


def _pick_tile(dim: int, preferred: int, units=(128, 8, 1)) -> int:
    """Largest tile <= `preferred` that divides `dim` (full dim if small)."""
    if dim <= preferred:
        return dim
    for unit in units:
        t = (preferred // unit) * unit
        while t >= unit:
            if dim % t == 0:
                return t
            t -= unit
    return dim


def cosine_linear(x: jax.Array, w: jax.Array, *, tm: int | None = None,
                  tn: int | None = None, tk: int | None = None,
                  use_bf16_matmul: bool = True) -> jax.Array:
    """x: (batch, in_features), w: (in_features, out_features) -> (batch, out)."""
    B, F_in = x.shape
    F_in_w, F_out = w.shape
    assert F_in == F_in_w

    # Tile selection: big tk (few grid steps), big tn (lane-dense output, fewer
    # x re-reads), tm as large as VMEM allows (ideally tm == B so the weight is
    # read from HBM exactly once per call).  Defaults stay under the v5e 16 MiB
    # default scoped-VMEM budget with double buffering, so no vmem_limit_bytes
    # override is needed on any generation.
    if tk is None:
        tk = _pick_tile(F_in, 1024)
    if tn is None:
        tn = _pick_tile(F_out, 512)
    if tm is None:
        tm = _pick_tile(B, 512)

    assert B % tm == 0 and F_out % tn == 0 and F_in % tk == 0, (
        "tile sizes must divide (batch, out_features, in_features)")

    grid = (B // tm, F_out // tn, F_in // tk)
    n_i, n_j, n_k = grid

    # Hoist xsq across j only when there are >=2 batch tiles: then the batch
    # axis carries the megacore parallelism and the hoisted j axis stays
    # un-sharded (required for correctness of the hoist).  With a single batch
    # tile we keep j "parallel" (v7x: 2 TCs) and recompute the cheap xsq.
    hoist_xsq = n_i >= 2
    if hoist_xsq:
        dims = ("parallel", "arbitrary", "arbitrary")
    else:
        dims = ("parallel", "parallel", "arbitrary")

    kernel = functools.partial(_cosine_linear_kernel,
                               hoist_xsq=hoist_xsq,
                               bf16_matmul=use_bf16_matmul)

    out_dtype = x.dtype
    bytes_accessed = (x.size * x.dtype.itemsize
                      + w.size * w.dtype.itemsize * n_i      # w re-streamed per batch tile
                      + B * F_out * jnp.dtype(out_dtype).itemsize)
    cost = pl.CostEstimate(flops=2 * B * F_in * F_out,
                           transcendentals=n_j * B + n_i * F_out,
                           bytes_accessed=bytes_accessed)

    return pl.pallas_call(
        kernel,
        out_shape=jax.ShapeDtypeStruct((B, F_out), out_dtype),
        grid_spec=pltpu.PrefetchScalarGridSpec(
            num_scalar_prefetch=0,
            grid=grid,
            in_specs=[
                pl.BlockSpec((tm, tk), lambda i, j, k: (i, k)),
                # If a profile ever shows exposed weight DMA at (i, j)
                # boundaries, add pipeline_mode=pl.Buffered(3) here.
                pl.BlockSpec((tk, tn), lambda i, j, k: (k, j)),
            ],
            out_specs=pl.BlockSpec((tm, tn), lambda i, j, k: (i, j)),
            scratch_shapes=[
                pltpu.VMEM((tm, tn), jnp.float32),   # matmul accumulator
                pltpu.VMEM((tm, 1), jnp.float32),    # per-row sum(x^2)
                pltpu.VMEM((1, tn), jnp.float32),    # per-column sum(w^2)
            ],
        ),
        compiler_params=pltpu.CompilerParams(dimension_semantics=dims),
        cost_estimate=cost,
    )(x, w)


def cosine_linear_ref(x: jax.Array, w: jax.Array) -> jax.Array:
    """Pure-JAX reference mirroring the PyTorch forward literally."""
    maxnorm = 1e-5
    col_norm = jnp.sqrt(jnp.sum(w * w, axis=0, keepdims=True))
    scale = jnp.where(col_norm > maxnorm, maxnorm / (col_norm + 1e-7), 1.0)
    ww = w * scale * 1e5
    xlen = jnp.sqrt(jnp.sum(x * x, axis=1, keepdims=True))
    wlen = jnp.sqrt(jnp.sum(ww * ww, axis=0, keepdims=True))
    cos = jnp.dot(x, ww, precision=jax.lax.Precision.HIGHEST)
    cos = cos / xlen / wlen
    cos = jnp.clip(cos, -1.0, 1.0)
    return cos * xlen


def init_weight(key, in_features: int, out_features: int) -> jax.Array:
    """Mirror of: torch.Tensor(in, out).uniform_(-1, 1).renorm_(2, 1, 1e-5).mul_(1e5)."""
    w = jax.random.uniform(key, (in_features, out_features),
                           dtype=jnp.float32, minval=-1.0, maxval=1.0)
    maxnorm = 1e-5
    col_norm = jnp.sqrt(jnp.sum(w * w, axis=0, keepdims=True))
    scale = jnp.where(col_norm > maxnorm, maxnorm / (col_norm + 1e-7), 1.0)
    return w * (scale * 1e5)


if __name__ == "__main__":
    # Small shapes that still exercise real multi-tile grids with K-accumulation.
    batch, in_features, out_features = 16, 256, 256

    key = jax.random.PRNGKey(0)
    k_w, k_x = jax.random.split(key)

    weight = init_weight(k_w, in_features, out_features)                  # (256, 256)
    x = jax.random.normal(k_x, (batch, in_features), dtype=jnp.float32)   # (16, 256)

    ref = cosine_linear_ref(x, weight)

    configs = [
        # grid (2, 2, 2): multiple batch tiles -> hoisted-xsq path, bf16 MXU.
        dict(tm=8, tn=128, tk=128, use_bf16_matmul=True),
        # grid (1, 2, 2): single batch tile (tm == B) path, bf16 MXU.
        dict(tm=16, tn=128, tk=128, use_bf16_matmul=True),
        # auto tiles (tm=B, tn=F_out, tk=F_in), f32 MXU path (tight numerics).
        dict(use_bf16_matmul=False),
    ]
    for cfg in configs:
        out = cosine_linear(x, weight, **cfg)
        jax.block_until_ready(out)
        assert out.shape == (batch, out_features)
        tol = 2e-2 if cfg.get("use_bf16_matmul", True) else 1e-3
        max_err = float(jnp.max(jnp.abs(out - ref)))
        assert bool(jnp.allclose(out, ref, atol=tol, rtol=tol)), (
            f"config {cfg}: max err {max_err}")

    print("KERNEL_OK")
</pallas_src>

<mosaic_0001>
module attributes {stable_mosaic.version = 11 : i64} {
  func.func @_cosine_linear_kernel(%arg0: i32, %arg1: i32, %arg2: i32, %arg3: memref<8x128xf32, #tpu.memory_space<vmem>>, %arg4: memref<128x128xf32, #tpu.memory_space<vmem>>, %arg5: memref<8x128xf32, #tpu.memory_space<vmem>>, %arg6: memref<8x128xf32, #tpu.memory_space<vmem>>, %arg7: memref<8x1xf32, #tpu.memory_space<vmem>>, %arg8: memref<1x128xf32, #tpu.memory_space<vmem>>) attributes {dimension_semantics = [#tpu.dimension_semantics<parallel>, #tpu.dimension_semantics<arbitrary>, #tpu.dimension_semantics<arbitrary>], iteration_bounds = array<i64: 2, 2, 2>, scalar_prefetch = 0 : i64, scratch_operands = 3 : i64, tpu.core_type = #tpu.core_type<tc>, window_params = [{transform_indices = @transform_0, window_bounds = array<i64: 8, 128>}, {transform_indices = @transform_1, window_bounds = array<i64: 128, 128>}, {transform_indices = @transform_2, window_bounds = array<i64: 8, 128>}]} {
    %c0_i32 = arith.constant 0 : i32
    %0 = arith.cmpi eq, %arg2, %c0_i32 : i32
    %1 = arith.extui %0 : i1 to i32
    %c0_i32_0 = arith.constant 0 : i32
    %2 = arith.cmpi ne, %1, %c0_i32_0 : i32
    scf.if %2 {
      %cst_19 = arith.constant 0.000000e+00 : f32
      %28 = vector.broadcast %cst_19 : f32 to vector<8x128xf32>
      %c0_20 = arith.constant 0 : index
      %c0_21 = arith.constant 0 : index
      %29 = vector.load %arg6[%c0_20, %c0_21] : memref<8x128xf32, #tpu.memory_space<vmem>>, vector<8x128xf32>
      tpu.vector_store %arg6[%c0_20, %c0_21], %28 {strides = array<i32>} : memref<8x128xf32, #tpu.memory_space<vmem>>, vector<8x128xf32>,
      %cst_22 = arith.constant 0.000000e+00 : f32
      %30 = vector.broadcast %cst_22 : f32 to vector<1x128xf32>
      %c0_23 = arith.constant 0 : index
      %c0_24 = arith.constant 0 : index
      %31 = vector.load %arg8[%c0_23, %c0_24] : memref<1x128xf32, #tpu.memory_space<vmem>>, vector<1x128xf32>
      tpu.vector_store %arg8[%c0_23, %c0_24], %30 {strides = array<i32>} : memref<1x128xf32, #tpu.memory_space<vmem>>, vector<1x128xf32>,
    } else {
    }
    %c0_i32_1 = arith.constant 0 : i32
    %3 = arith.cmpi eq, %arg1, %c0_i32_1 : i32
    %c0_i32_2 = arith.constant 0 : i32
    %4 = arith.cmpi eq, %arg2, %c0_i32_2 : i32
    %5 = arith.andi %3, %4 : i1
    %6 = arith.extui %5 : i1 to i32
    %c0_i32_3 = arith.constant 0 : i32
    %7 = arith.cmpi ne, %6, %c0_i32_3 : i32
    scf.if %7 {
      %cst_19 = arith.constant 0.000000e+00 : f32
      %28 = vector.broadcast %cst_19 : f32 to vector<8x1xf32>
      %c0_20 = arith.constant 0 : index
      %c0_21 = arith.constant 0 : index
      %29 = vector.load %arg7[%c0_20, %c0_21] : memref<8x1xf32, #tpu.memory_space<vmem>>, vector<8x1xf32>
      tpu.vector_store %arg7[%c0_20, %c0_21], %28 {strides = array<i32>} : memref<8x1xf32, #tpu.memory_space<vmem>>, vector<8x1xf32>,
    } else {
    }
    %c0 = arith.constant 0 : index
    %c0_4 = arith.constant 0 : index
    %8 = vector.load %arg3[%c0, %c0_4] : memref<8x128xf32, #tpu.memory_space<vmem>>, vector<8x128xf32>
    %c0_5 = arith.constant 0 : index
    %c0_6 = arith.constant 0 : index
    %9 = vector.load %arg4[%c0_5, %c0_6] : memref<128x128xf32, #tpu.memory_space<vmem>>, vector<128x128xf32>
    %10 = arith.truncf %8 : vector<8x128xf32> to vector<8x128xbf16>
    %11 = arith.truncf %9 : vector<128x128xf32> to vector<128x128xbf16>
    %c0_7 = arith.constant 0 : index
    %c0_8 = arith.constant 0 : index
    %12 = vector.load %arg6[%c0_7, %c0_8] : memref<8x128xf32, #tpu.memory_space<vmem>>, vector<8x128xf32>
    %cst = arith.constant dense<0.000000e+00> : vector<8x128xf32>
    %13 = tpu.matmul %10, %11, %cst {dimension_numbers = #tpu.dot_dimension_numbers<[1], [0], [0], [1], [0, 0, 1, 1], [], []>} : vector<8x128xbf16>, vector<128x128xbf16>, vector<8x128xf32> -> vector<8x128xf32>
    %14 = arith.addf %12, %13 : vector<8x128xf32>
    %c0_9 = arith.constant 0 : index
    %c0_10 = arith.constant 0 : index
    %15 = vector.load %arg6[%c0_9, %c0_10] : memref<8x128xf32, #tpu.memory_space<vmem>>, vector<8x128xf32>
    tpu.vector_store %arg6[%c0_9, %c0_10], %14 {strides = array<i32>} : memref<8x128xf32, #tpu.memory_space<vmem>>, vector<8x128xf32>,
    %c0_11 = arith.constant 0 : index
    %c0_12 = arith.constant 0 : index
    %16 = vector.load %arg8[%c0_11, %c0_12] : memref<1x128xf32, #tpu.memory_space<vmem>>, vector<1x128xf32>
    %17 = arith.mulf %9, %9 : vector<128x128xf32>
    %cst_13 = arith.constant dense<0.000000e+00> : vector<128xf32>
    %18 = vector.multi_reduction <add>, %17, %cst_13 [0] : vector<128x128xf32> to vector<128xf32>
    %19 = vector.shape_cast %18 : vector<128xf32> to vector<1x128xf32>
    %20 = arith.addf %16, %19 : vector<1x128xf32>
    %c0_14 = arith.constant 0 : index
    %c0_15 = arith.constant 0 : index
    %21 = vector.load %arg8[%c0_14, %c0_15] : memref<1x128xf32, #tpu.memory_space<vmem>>, vector<1x128xf32>
    tpu.vector_store %arg8[%c0_14, %c0_15], %20 {strides = array<i32>} : memref<1x128xf32, #tpu.memory_space<vmem>>, vector<1x128xf32>,
    %c0_i32_16 = arith.constant 0 : i32
    %22 = arith.cmpi eq, %arg1, %c0_i32_16 : i32
    %23 = arith.extui %22 : i1 to i32
    %c0_i32_17 = arith.constant 0 : i32
    %24 = arith.cmpi ne, %23, %c0_i32_17 : i32
    scf.if %24 {
      %c0_19 = arith.constant 0 : index
      %c0_20 = arith.constant 0 : index
      %28 = vector.load %arg7[%c0_19, %c0_20] : memref<8x1xf32, #tpu.memory_space<vmem>>, vector<8x1xf32>
      %29 = arith.mulf %8, %8 : vector<8x128xf32>
      %cst_21 = arith.constant dense<0.000000e+00> : vector<8xf32>
      %30 = vector.multi_reduction <add>, %29, %cst_21 [1] : vector<8x128xf32> to vector<8xf32>
      %31 = vector.shape_cast %30 : vector<8xf32> to vector<8x1xf32>
      %32 = arith.addf %28, %31 : vector<8x1xf32>
      %c0_22 = arith.constant 0 : index
      %c0_23 = arith.constant 0 : index
      %33 = vector.load %arg7[%c0_22, %c0_23] : memref<8x1xf32, #tpu.memory_space<vmem>>, vector<8x1xf32>
      tpu.vector_store %arg7[%c0_22, %c0_23], %32 {strides = array<i32>} : memref<8x1xf32, #tpu.memory_space<vmem>>, vector<8x1xf32>,
    } else {
    }
    %c1_i32 = arith.constant 1 : i32
    %25 = arith.cmpi eq, %arg2, %c1_i32 : i32
    %26 = arith.extui %25 : i1 to i32
    %c0_i32_18 = arith.constant 0 : i32
    %27 = arith.cmpi ne, %26, %c0_i32_18 : i32
    scf.if %27 {
      %c0_19 = arith.constant 0 : index
      %c0_20 = arith.constant 0 : index
      %28 = vector.load %arg7[%c0_19, %c0_20] : memref<8x1xf32, #tpu.memory_space<vmem>>, vector<8x1xf32>
      %c0_21 = arith.constant 0 : index
      %c0_22 = arith.constant 0 : index
      %29 = vector.load %arg8[%c0_21, %c0_22] : memref<1x128xf32, #tpu.memory_space<vmem>>, vector<1x128xf32>
      %30 = math.rsqrt %28 : vector<8x1xf32>
      %31 = math.rsqrt %29 : vector<1x128xf32>
      %32 = arith.mulf %28, %30 : vector<8x1xf32>
      %c0_23 = arith.constant 0 : index
      %c0_24 = arith.constant 0 : index
      %33 = vector.load %arg6[%c0_23, %c0_24] : memref<8x128xf32, #tpu.memory_space<vmem>>, vector<8x128xf32>
      %34 = vector.broadcast %30 : vector<8x1xf32> to vector<8x128xf32>
      %35 = arith.mulf %33, %34 : vector<8x128xf32>
      %36 = vector.broadcast %31 : vector<1x128xf32> to vector<8x128xf32>
      %37 = arith.mulf %35, %36 : vector<8x128xf32>
      %cst_25 = arith.constant -1.000000e+00 : f32
      %cst_26 = arith.constant 1.000000e+00 : f32
      %38 = vector.broadcast %cst_25 : f32 to vector<8x128xf32>
      %39 = arith.maximumf %38, %37 : vector<8x128xf32>
      %40 = vector.broadcast %cst_26 : f32 to vector<8x128xf32>
      %41 = arith.minimumf %40, %39 : vector<8x128xf32>
      %42 = vector.broadcast %32 : vector<8x1xf32> to vector<8x128xf32>
      %43 = arith.mulf %41, %42 : vector<8x128xf32>
      %c0_27 = arith.constant 0 : index
      %c0_28 = arith.constant 0 : index
      %44 = vector.load %arg5[%c0_27, %c0_28] : memref<8x128xf32, #tpu.memory_space<vmem>>, vector<8x128xf32>
      tpu.vector_store %arg5[%c0_27, %c0_28], %43 {strides = array<i32>} : memref<8x128xf32, #tpu.memory_space<vmem>>, vector<8x128xf32>,
    } else {
    }
    return
  }
  func.func @transform_0(%arg0: i32, %arg1: i32, %arg2: i32) -> (i32, i32) {
    %c0_i32 = arith.constant 0 : i32
    return %arg0, %arg2 : i32, i32
  }
  func.func @transform_1(%arg0: i32, %arg1: i32, %arg2: i32) -> (i32, i32) {
    %c0_i32 = arith.constant 0 : i32
    return %arg2, %arg1 : i32, i32
  }
  func.func @transform_2(%arg0: i32, %arg1: i32, %arg2: i32) -> (i32, i32) {
    %c0_i32 = arith.constant 0 : i32
    return %arg0, %arg1 : i32, i32
  }
}

</mosaic_0001>

<llo_original>
// kernel: tpu_custom_call.1
$region0: #{tpu_custom_call.1}
  #allocation0 [shape = 'u32[]', space=smem, size = 0x4, offset = 0x4, fixed_abs, tag = 'smem constant byte address 0x4 - core index']
  #allocation1 [shape = 'u32[144,128]{1,0:T(1,128)}', space=vmem, size = 0x12000, scoped, tag = 'internal scratch']
  #allocation2 [shape = 'f32[8,128]{1,0:T(8,128)}', space=vmem, size = 0x1000, scoped, tag = 'scratch operand']
  #allocation3 [shape = 'f32[8,1]{1,0:T(8,128)}', space=vmem, size = 0x1000, scoped, tag = 'scratch operand']
  #allocation4 [shape = 'f32[1,128]{1,0:T(1,128)}', space=vmem, size = 0x200, scoped, tag = 'scratch operand']
  %s0 = inlined_call_operand.hbm [shape: f32[16,256], index: 0, kind: input, shape index: {}]
  %s1 = inlined_call_operand.hbm [shape: f32[256,256], index: 1, kind: input, shape index: {}]
  %s2 = inlined_call_operand.hbm [shape: f32[16,256], index: 2, kind: output, shape index: {}]
  %s3 = sld [smem:[#allocation0]]
  $region65: #{tpu_custom_call.1} parent=0
    _
  %s5 = ssub.s32 1, %s3
  %s6 = scalar_select 0, %s5, %s3
  $region1: #{tpu_custom_call.1} parent=0
    #allocation5 [shape = 'u8[8192]{0}', space=vmem, size = 0x2000, scoped, tag = 'input window, operand 0']
    #allocation6 [shape = 's32[2]{0}', space=sflag, size = 0x8, scoped, tag = 'scoped memory for tpu_custom_call.1']
    #allocation7 [shape = 's32[2]{0}', space=sflag, size = 0x8, scoped, tag = 'scoped memory for tpu_custom_call.1']
    #allocation8 [shape = 'u8[131072]{0}', space=vmem, size = 0x20000, scoped, tag = 'input window, operand 1']
    #allocation9 [shape = 's32[2]{0}', space=sflag, size = 0x8, scoped, tag = 'scoped memory for tpu_custom_call.1']
    #allocation10 [shape = 'u8[8192]{0}', space=vmem, size = 0x2000, scoped, tag = 'output window, operand 0']
    %7 = vsyncpa [#allocation6], 0
    %s8 = scalar_lea.sflag [#allocation6], 1
    %9 = vsyncpa %s8, 0
    %10 = vsyncpa [#allocation9], 0
    %s11 = scalar_lea.sflag [#allocation9], 1
    %12 = vsyncpa %s11, 0
    %13 = vsyncpa [#allocation7], 0
    %s14 = scalar_lea.sflag [#allocation7], 1
    %15 = vsyncpa %s14, 0
    loop: start=0, step=1, limit=10
    $region2: #{tpu_custom_call.1} parent=1 // loop_pre_header
      _
    $region3: #{tpu_custom_call.1} parent=1 // loop_header
      %s17 = sphi 0, %s21
      %p18 = scmp.ge.s32.totalorder %s17, 10
      %s24 = sphi 0, %s43
      %s25 = sphi 0, %s39
      %s26 = sphi 0, %s35
      %s27 = sphi 0, %s24
      %s28 = sphi 0, %s25
      %s29 = sphi 0, %s26
      %s30 = sphi 0, %s27
      %s31 = sphi 0, %s28
      %s32 = sphi 0, %s29
      %s48 = sphi 0, %s50
      %s51 = sphi 0, %s48
      %s52 = sphi 0, %s51
      %s68 = sphi 0, %s52
      %s76 = sphi 0, %s78
      %s79 = sphi 0, %s76
      %s80 = sphi 0, %s79
      %s96 = sphi 0, %s80
      %s104 = sphi 0, %s106
      %s107 = sphi 0, %s104
      %s108 = sphi 0, %s107
      %s124 = sphi 0, %s108
    $region4: #{tpu_custom_call.1} parent=1 // loop_header_branch
      %20 = sbr.rel (%p18) target = $region8
    $region5: #{tpu_custom_call.1} parent=1 // loop_body
      %s22 = ssub.s32 %s17, 1
      %s23 = ssub.s32 %s17, 2
      %s33 = sadd.s32 1, %s26
      %p34 = scmp.ge.s32.totalorder %s33, 2
      %s35 = scalar_select %p34, 0, %s33
      %s36 = sadd.s32 1, %s25
      %s37 = scalar_select %p34, %s36, %s25
      %p38 = scmp.ge.s32.totalorder %s37, 2
      %s39 = scalar_select %p38, 0, %s37
      %s40 = sadd.s32 1, %s24
      %s41 = scalar_select %p38, %s40, %s24
      %p42 = scmp.ge.s32.totalorder %s41, 2
      %s43 = scalar_select %p42, 0, %s41
      %s44 = ssub.s32 %s24, %s43
      %s45 = ssub.s32 %s26, %s35
      %s46 = sor.u32 %s44, %s45
      %p47 = scmp.eq.s32.totalorder %s46, 0
      %s49 = sadd.s32 %s48, 1
      %s50 = scalar_select %p47, %s48, %s49
      %p53 = pneg %p47
      %p54 = scmp.eq.s32.totalorder %s17, 7
      %p55 = por %p53, %p54
      %p56 = scmp.ne.s32.totalorder %s48, %s51
      %p57 = scmp.eq.s32.totalorder %s17, 0
      %p58 = por %p56, %p57
      %p59 = scmp.ne.s32.totalorder %s48, %s51
      %p60 = scmp.eq.s32.totalorder %s22, 7
      %p61 = por %p59, %p60
      %p62 = scmp.ne.s32.totalorder %s51, %s52
      %p63 = scmp.eq.s32.totalorder %s22, 0
      %p64 = por %p62, %p63
      %p65 = scmp.ne.s32.totalorder %s51, %s52
      %p66 = scmp.eq.s32.totalorder %s23, 7
      %p67 = por %p65, %p66
      %p69 = scmp.ne.s32.totalorder %s52, %s68
      %p70 = scmp.eq.s32.totalorder %s23, 0
      %p71 = por %p69, %p70
      %s72 = ssub.s32 %s26, %s35
      %s73 = ssub.s32 %s25, %s39
      %s74 = sor.u32 %s72, %s73
      %p75 = scmp.eq.s32.totalorder %s74, 0
      %s77 = sadd.s32 %s76, 1
      %s78 = scalar_select %p75, %s76, %s77
      %p81 = pneg %p75
      %p82 = scmp.eq.s32.totalorder %s17, 7
      %p83 = por %p81, %p82
      %p84 = scmp.ne.s32.totalorder %s76, %s79
      %p85 = scmp.eq.s32.totalorder %s17, 0
      %p86 = por %p84, %p85
      %p87 = scmp.ne.s32.totalorder %s76, %s79
      %p88 = scmp.eq.s32.totalorder %s22, 7
      %p89 = por %p87, %p88
      %p90 = scmp.ne.s32.totalorder %s79, %s80
      %p91 = scmp.eq.s32.totalorder %s22, 0
      %p92 = por %p90, %p91
      %p93 = scmp.ne.s32.totalorder %s79, %s80
      %p94 = scmp.eq.s32.totalorder %s23, 7
      %p95 = por %p93, %p94
      %p97 = scmp.ne.s32.totalorder %s80, %s96
      %p98 = scmp.eq.s32.totalorder %s23, 0
      %p99 = por %p97, %p98
      %s100 = ssub.s32 %s24, %s43
      %s101 = ssub.s32 %s25, %s39
      %s102 = sor.u32 %s100, %s101
      %p103 = scmp.eq.s32.totalorder %s102, 0
      %s105 = sadd.s32 %s104, 1
      %s106 = scalar_select %p103, %s104, %s105
      %p109 = pneg %p103
      %p110 = scmp.eq.s32.totalorder %s17, 7
      %p111 = por %p109, %p110
      %p112 = scmp.ne.s32.totalorder %s104, %s107
      %p113 = scmp.eq.s32.totalorder %s17, 0
      %p114 = por %p112, %p113
      %p115 = scmp.ne.s32.totalorder %s104, %s107
      %p116 = scmp.eq.s32.totalorder %s22, 7
      %p117 = por %p115, %p116
      %p118 = scmp.ne.s32.totalorder %s107, %s108
      %p119 = scmp.eq.s32.totalorder %s22, 0
      %p120 = por %p118, %p119
      %p121 = scmp.ne.s32.totalorder %s107, %s108
      %p122 = scmp.eq.s32.totalorder %s23, 7
      %p123 = por %p121, %p122
      %p125 = scmp.ne.s32.totalorder %s108, %s124
      %p126 = scmp.eq.s32.totalorder %s23, 0
      %p127 = por %p125, %p126
      %p128 = scmp.le.s32.totalorder 1, %s17
      %p129 = scmp.lt.s32.totalorder %s17, 9
      %p130 = pnand %p128, %p129
      %p131 = pneg %p130
      // Predicated region
      $region9: #{tpu_custom_call.1} parent=5 // pred_check
        _
      $region10: #{tpu_custom_call.1} parent=5 // pred_check_branch
        %133 = sbr.rel (%p130) target = $region12
      $region11: #{tpu_custom_call.1} parent=5 // pred_region
        %s134 = ssub.s32 %s17, 1
      $region12: #{tpu_custom_call.1} parent=5 // pred_fallthru
        _
      %p135 = scmp.lt.s32.totalorder %s17, 8
      // Predicated region
      $region13: #{tpu_custom_call.1} parent=5 // pred_check
        %p136 = pneg %p135
      $region14: #{tpu_custom_call.1} parent=5 // pred_check_branch
        %138 = sbr.rel (%p136) target = $region16
      $region15: #{tpu_custom_call.1} parent=5 // pred_region
        // Predicated region
        $region17: #{tpu_custom_call.1} parent=15 // pred_check
          %p139 = pneg %p58
        $region18: #{tpu_custom_call.1} parent=15 // pred_check_branch
          %141 = sbr.rel (%p139) target = $region20
        $region19: #{tpu_custom_call.1} parent=15 // pred_region
          %s142 = sand.u32 %s48, 1
          %s143 = scalar_lea.sflag [#allocation6], %s142
          %s144 = sand.u32 %s48, 1
          %s145 = smul.addr %s144, 8
          %s146 = scalar_lea.vmem [#allocation5], %s145
          %s148 = ssub.s32 128, 128
          %149 = vsyncadd %s143, %s148
          %s150 = smul.addr %s24, 2
          %s151 = sadd.s32 %s26, %s150
          %s152 = smul.addr %s151, 128
          %s153 = scalar_lea.hbm %s0, %s152
          %s155 = sshll.u32 %s146, 4
          %s156 = int_to_ptr.vmem [resolvable:$true] %s155
          %158 = dma.hbm_to_vmem [thread:$0]  %s153, 128, %s156, %s143
        $region20: #{tpu_custom_call.1} parent=15 // pred_fallthru
          _
        // Predicated region
        $region21: #{tpu_custom_call.1} parent=15 // pred_check
          %p159 = pneg %p86
        $region22: #{tpu_custom_call.1} parent=15 // pred_check_branch
          %161 = sbr.rel (%p159) target = $region24
        $region23: #{tpu_custom_call.1} parent=15 // pred_region
          %s162 = sand.u32 %s76, 1
          %s163 = scalar_lea.sflag [#allocation9], %s162
          %s164 = sand.u32 %s76, 1
          %s165 = smul.addr %s164, 128
          %s166 = scalar_lea.vmem [#allocation8], %s165
          %s167 = smul.u32 16, %s26
          %s169 = ssub.s32 2048, 2048
          %170 = vsyncadd %s163, %s169
          %s171 = smul.addr %s167, 2
          %s172 = sadd.s32 %s25, %s171
          %s173 = smul.addr %s172, 128
          %s174 = scalar_lea.hbm %s1, %s173
          %s175 = sshll.u32 %s166, 4
          %s176 = int_to_ptr.vmem [resolvable:$true] %s175
          %181 = dma.hbm_to_vmem [thread:$0]  %s174, 2048, %s176, %s163, 256, 128, 8
        $region24: #{tpu_custom_call.1} parent=15 // pred_fallthru
          _
      $region16: #{tpu_custom_call.1} parent=5 // pred_fallthru
        _
      %p182 = scmp.le.s32.totalorder 1, %s17
      %p183 = scmp.lt.s32.totalorder %s17, 9
      %p184 = pnand %p182, %p183
      %p185 = pneg %p184
      // Predicated region
      $region25: #{tpu_custom_call.1} parent=5 // pred_check
        _
      $region26: #{tpu_custom_call.1} parent=5 // pred_check_branch
        %187 = sbr.rel (%p184) target = $region28
      $region27: #{tpu_custom_call.1} parent=5 // pred_region
        %s188 = ssub.s32 %s17, 1
        %s189 = sand.u32 %s51, 1
        %s190 = scalar_lea.sflag [#allocation6], %s189
        %s191 = sand.u32 %s51, 1
        %s192 = smul.addr %s191, 8
        %s193 = scalar_lea.vmem [#allocation5], %s192
        // Predicated region
        $region29: #{tpu_custom_call.1} parent=27 // pred_check
          %p194 = pneg %p64
        $region30: #{tpu_custom_call.1} parent=27 // pred_check_branch
          %196 = sbr.rel (%p194) target = $region32
        $region31: #{tpu_custom_call.1} parent=27 // pred_region
          %197 = dma.done %s190, 128
        $region32: #{tpu_custom_call.1} parent=27 // pred_fallthru
          _
        %s198 = sand.u32 %s79, 1
        %s199 = scalar_lea.sflag [#allocation9], %s198
        %s200 = sand.u32 %s79, 1
        %s201 = smul.addr %s200, 128
        %s202 = scalar_lea.vmem [#allocation8], %s201
        // Predicated region
        $region33: #{tpu_custom_call.1} parent=27 // pred_check
          %p203 = pneg %p92
        $region34: #{tpu_custom_call.1} parent=27 // pred_check_branch
          %205 = sbr.rel (%p203) target = $region36
        $region35: #{tpu_custom_call.1} parent=27 // pred_region
          %206 = dma.done %s199, 2048
        $region36: #{tpu_custom_call.1} parent=27 // pred_fallthru
          _
        %s207 = sand.u32 %s51, 1
        %s208 = scalar_lea.sflag [#allocation6], %s207
        %s209 = sand.u32 %s51, 1
        %s210 = smul.addr %s209, 8
        %s211 = scalar_lea.vmem [#allocation5], %s210
        %p212 = pneg %p64
        %p213 = pneg %p61
        %s214 = sand.u32 %s79, 1
        %s215 = scalar_lea.sflag [#allocation9], %s214
        %s216 = sand.u32 %s79, 1
        %s217 = smul.addr %s216, 128
        %s218 = scalar_lea.vmem [#allocation8], %s217
        %p219 = pneg %p92
        %p220 = pneg %p89
        %p221 = pneg %p120
        %p222 = pneg %p117
        %s223 = sand.u32 %s107, 1
        %s224 = scalar_lea.sflag [#allocation7], %s223
        %s225 = sand.u32 %s107, 1
        %s226 = smul.addr %s225, 8
        %s227 = scalar_lea.vmem [#allocation10], %s226
        %s228 = smul.u32 16, %s29
        %p230 = scmp.eq.s32.totalorder %s29, 0
        // Predicated region
        $region37: #{tpu_custom_call.1} parent=27 // pred_check
          %p231 = pneg %p230
        $region38: #{tpu_custom_call.1} parent=27 // pred_check_branch
          %233 = sbr.rel (%p231) target = $region40
        $region39: #{tpu_custom_call.1} parent=27 // pred_region
          %234 = vst [vmem:[#allocation2] sm:$0xff] 0.0
          %235 = vst [vmem:[#allocation4] sm:$0x1] 0.0
        $region40: #{tpu_custom_call.1} parent=27 // pred_fallthru
          _
        %p236 = scmp.eq.s32.totalorder %s28, 0
        %p237 = pnand %p236, %p230
        %p238 = pneg %p237
        // Predicated region
        $region41: #{tpu_custom_call.1} parent=27 // pred_check
          _
        $region42: #{tpu_custom_call.1} parent=27 // pred_check_branch
          %240 = sbr.rel (%p237) target = $region44
        $region43: #{tpu_custom_call.1} parent=27 // pred_region
          %vm241 = vcmask 7168
          %242 = vst.msk [vmem:[#allocation3] sm:$0xff] %vm241, 0.0
        $region44: #{tpu_custom_call.1} parent=27 // pred_fallthru
          _
        %v243 = vld [vmem:[%s193] sm:$0xff]
        %v244 = vld [vmem:[%s202] sm:$0xff]
        %v245 = vld [vmem:[%s202 + $0x8] sm:$0xff]
        %v246 = vld [vmem:[%s202 + $0x10] sm:$0xff]
        %v247 = vld [vmem:[%s202 + $0x18] sm:$0xff]
        %v248 = vld [vmem:[%s202 + $0x20] sm:$0xff]
        %v249 = vld [vmem:[%s202 + $0x28] sm:$0xff]
        %v250 = vld [vmem:[%s202 + $0x30] sm:$0xff]
        %v251 = vld [vmem:[%s202 + $0x38] sm:$0xff]
        %v252 = vld [vmem:[%s202 + $0x40] sm:$0xff]
        %v253 = vld [vmem:[%s202 + $0x48] sm:$0xff]
        %v254 = vld [vmem:[%s202 + $0x50] sm:$0xff]
        %v255 = vld [vmem:[%s202 + $0x58] sm:$0xff]
        %v256 = vld [vmem:[%s202 + $0x60] sm:$0xff]
        %v257 = vld [vmem:[%s202 + $0x68] sm:$0xff]
        %v258 = vld [vmem:[%s202 + $0x70] sm:$0xff]
        %v259 = vld [vmem:[%s202 + $0x78] sm:$0xff]
        %v260 = vpack.c.bf16 %v243, %v243
        %v261 = vpack.c.bf16 %v245, %v244
        %v262 = vpack.c.bf16 %v247, %v246
        %v263 = vpack.c.bf16 %v249, %v248
        %v264 = vpack.c.bf16 %v251, %v250
        %v265 = vpack.c.bf16 %v253, %v252
        %v266 = vpack.c.bf16 %v255, %v254
        %v267 = vpack.c.bf16 %v257, %v256
        %v268 = vpack.c.bf16 %v259, %v258
        %v269 = vld [vmem:[#allocation2] sm:$0xff]
        %270 = vmatprep.subr.bf16.mxu0 0
        %271 = vmatpush1.bf16.msra.mxu0 %v268
        %272 = vmatprep.subr.bf16.mxu0 0
        %273 = vmatpush1.bf16.msra.mxu0 %v267
        %274 = vmatprep.subr.bf16.mxu0 0
        %275 = vmatpush1.bf16.msra.mxu0 %v266
        %276 = vmatprep.subr.bf16.mxu0 0
        %277 = vmatpush1.bf16.msra.mxu0 %v265
        %278 = vmatprep.subr.bf16.mxu0 0
        %279 = vmatpush1.bf16.msra.mxu0 %v264
        %280 = vmatprep.subr.bf16.mxu0 0
        %281 = vmatpush1.bf16.msra.mxu0 %v263
        %282 = vmatprep.subr.bf16.mxu0 0
        %283 = vmatpush1.bf16.msra.mxu0 %v262
        %284 = vmatprep.subr.bf16.mxu0 0
        %285 = vmatpush1.bf16.msra.mxu0 %v261
        %286 = vmatprep.subr.bf16.mxu0 0
        %287 = vmatpush2.bf16.msra.mxu0 0
        %288 = vmatprep.subr.bf16.mxu0 0
        %289 = vmatpush2.bf16.msra.mxu0 0
        %290 = vmatprep.subr.bf16.mxu0 0
        %291 = vmatpush2.bf16.msra.mxu0 0
        %292 = vmatprep.subr.bf16.mxu0 0
        %293 = vmatpush2.bf16.msra.mxu0 0
        %294 = vmatprep.subr.bf16.mxu0 0
        %295 = vmatpush2.bf16.msra.mxu0 0
        %296 = vmatprep.subr.bf16.mxu0 0
        %297 = vmatpush2.bf16.msra.mxu0 0
        %298 = vmatprep.subr.bf16.mxu0 0
        %299 = vmatpush2.bf16.msra.mxu0 0
        %300 = vmatprep.subr.bf16.mxu0 0
        %301 = vmatpush2.bf16.msra.mxu0 0
        %302 = vmatprep.mubr.bf16.mxu0 0
        %303 = vmatmul.mubr.bf16.gmra.mxu0 %v260
        %v304 = vpop.f32.mrf.mxu0
        %v305 = vadd.f32 0.0, %v304
        %v306 = vpop.f32.mrf.mxu0
        %v307 = vpop.f32.mrf.mxu0
        %v308 = vpop.f32.mrf.mxu0
        %309 = vdwg.mxu0
        %v310 = vadd.f32 %v269, %v305
        %311 = vst [vmem:[#allocation2] sm:$0xff] %v310
        %v312 = vld [vmem:[#allocation4] sm:$0x1]
        %v313 = vmul.f32 %v244, %v244
        %v314 = vmul.f32 %v245, %v245
        %v315 = vmul.f32 %v246, %v246
        %v316 = vmul.f32 %v247, %v247
        %v317 = vmul.f32 %v248, %v248
        %v318 = vmul.f32 %v249, %v249
        %v319 = vmul.f32 %v250, %v250
        %v320 = vmul.f32 %v251, %v251
        %v321 = vmul.f32 %v252, %v252
        %v322 = vmul.f32 %v253, %v253
        %v323 = vmul.f32 %v254, %v254
        %v324 = vmul.f32 %v255, %v255
        %v325 = vmul.f32 %v256, %v256
        %v326 = vmul.f32 %v257, %v257
        %v327 = vmul.f32 %v258, %v258
        %v328 = vmul.f32 %v259, %v259
        %v329 = vadd.f32 %v313, %v314
        %v330 = vadd.f32 %v329, %v315
        %v331 = vadd.f32 %v330, %v316
        %v332 = vadd.f32 %v331, %v317
        %v333 = vadd.f32 %v332, %v318
        %v334 = vadd.f32 %v333, %v319
        %v335 = vadd.f32 %v334, %v320
        %v336 = vadd.f32 %v335, %v321
        %v337 = vadd.f32 %v336, %v322
        %v338 = vadd.f32 %v337, %v323
        %v339 = vadd.f32 %v338, %v324
        %v340 = vadd.f32 %v339, %v325
        %v341 = vadd.f32 %v340, %v326
        %v342 = vadd.f32 %v341, %v327
        %v343 = vadd.f32 %v342, %v328
        %v344 = vrot.slane %v343, 4
        %v345 = vadd.f32 %v343, %v344
        %v346 = vrot.slane %v345, 2
        %v347 = vadd.f32 %v345, %v346
        %v348 = vrot.slane %v347, 1
        %v349 = vadd.f32 %v347, %v348
        %v350 = vadd.f32 %v312, %v349
        %351 = vst [vmem:[#allocation4] sm:$0x1] %v350
        // Predicated region
        $region45: #{tpu_custom_call.1} parent=27 // pred_check
          %p352 = pneg %p236
        $region46: #{tpu_custom_call.1} parent=27 // pred_check_branch
          %354 = sbr.rel (%p352) target = $region48
        $region47: #{tpu_custom_call.1} parent=27 // pred_region
          %v355 = vld [vmem:[#allocation3] sm:$0xff]
          %v356 = vmul.f32 %v243, %v243
          %357 = vadd.xlane.f32.xlu0 %v356
          %v358 = vpop.xlane.xlu0 %357
          %v359 = vadd.f32 %v355, %v358
          %vm360 = vcmask 7168
          %361 = vst.msk [vmem:[#allocation3] sm:$0xff] %vm360, %v359
        $region48: #{tpu_custom_call.1} parent=27 // pred_fallthru
          _
        %p362 = scmp.eq.s32.totalorder %s29, 1
        // Predicated region
        $region49: #{tpu_custom_call.1} parent=27 // pred_check
          %p363 = pneg %p362
        $region50: #{tpu_custom_call.1} parent=27 // pred_check_branch
          %365 = sbr.rel (%p363) target = $region52
        $region51: #{tpu_custom_call.1} parent=27 // pred_region
          %v366 = vld [vmem:[#allocation3] sm:$0xff]
          %v367 = vld [vmem:[#allocation4] sm:$0x1]
          %v368 = vrsqrt.pop %v366
          %v369 = vrsqrt.pop %v367
          %v370 = vmul.f32 %v366, %v368
          %v371 = vld [vmem:[#allocation2] sm:$0xff]
          %373 = vset.pattern.permute.xlu0 0
          %374 = vperm.xlu0 %373, %v368
          %v375 = vpop.permute.xlu0 %374
          %v377 = vmul.f32 %v371, %v375
          %v379 = vlaneseq
          %v380 = vshrl.u32 %v379, 7
          %v381 = vsub.s32 0, %v380
          %v382 = vrot.slane %v369, %v381
          %v384 = vmul.f32 %v377, %v382
          %v385 = vmax.f32 %v384, -1.0
          %v386 = vmin.f32 %v385, 1.0
          %388 = vset.pattern.permute.xlu0 0
          %389 = vperm.xlu0 %388, %v370
          %v390 = vpop.permute.xlu0 %389
          %v392 = vmul.f32 %v386, %v390
          %393 = vst [vmem:[%s227] sm:$0xff] %v392
        $region52: #{tpu_custom_call.1} parent=27 // pred_fallthru
          _
        %s394 = sand.u32 %s107, 1
        %s395 = scalar_lea.sflag [#allocation7], %s394
        %s396 = sand.u32 %s107, 1
        %s397 = smul.addr %s396, 8
        %s398 = scalar_lea.vmem [#allocation10], %s397
        // Predicated region
        $region53: #{tpu_custom_call.1} parent=27 // pred_check
          %p399 = pneg %p117
        $region54: #{tpu_custom_call.1} parent=27 // pred_check_branch
          %401 = sbr.rel (%p399) target = $region56
        $region55: #{tpu_custom_call.1} parent=27 // pred_region
          %s403 = ssub.s32 128, 128
          %404 = vsyncadd %s395, %s403
          %s405 = smul.addr %s27, 2
          %s406 = sadd.s32 %s28, %s405
          %s407 = smul.addr %s406, 128
          %s408 = scalar_lea.hbm %s2, %s407
          %s410 = sshll.u32 %s398, 4
          %s411 = int_to_ptr.vmem [resolvable:$true] %s410
          %413 = dma.vmem_to_hbm [thread:$0]  %s411, 128, %s408, %s395
        $region56: #{tpu_custom_call.1} parent=27 // pred_fallthru
          _
      $region28: #{tpu_custom_call.1} parent=5 // pred_fallthru
        _
      %p414 = scmp.le.s32.totalorder 2, %s17
      // Predicated region
      $region57: #{tpu_custom_call.1} parent=5 // pred_check
        %p415 = pneg %p414
      $region58: #{tpu_custom_call.1} parent=5 // pred_check_branch
        %417 = sbr.rel (%p415) target = $region60
      $region59: #{tpu_custom_call.1} parent=5 // pred_region
        %s418 = ssub.s32 %s17, 2
        // Predicated region
        $region61: #{tpu_custom_call.1} parent=59 // pred_check
          %p419 = pneg %p123
        $region62: #{tpu_custom_call.1} parent=59 // pred_check_branch
          %421 = sbr.rel (%p419) target = $region64
        $region63: #{tpu_custom_call.1} parent=59 // pred_region
          %s422 = sand.u32 %s108, 1
          %s423 = scalar_lea.sflag [#allocation7], %s422
          %s424 = sand.u32 %s108, 1
          %s425 = smul.addr %s424, 8
          %s426 = scalar_lea.vmem [#allocation10], %s425
          %427 = dma.done %s423, 128
        $region64: #{tpu_custom_call.1} parent=59 // pred_fallthru
          _
      $region60: #{tpu_custom_call.1} parent=5 // pred_fallthru
        _
    $region6: #{tpu_custom_call.1} parent=1 // loop_footer
      %s21 = sadd.s32 1, %s17
    $region7: #{tpu_custom_call.1} parent=1 // loop_footer_branch
      %16 = sbr.rel target = $region3
    $region8: #{tpu_custom_call.1} parent=1 // loop_exit
      _
    %428 = vsyncpa [#allocation6], 1
    %s429 = scalar_lea.sflag [#allocation6], 1
    %430 = vsyncpa %s429, 1
    %431 = vsyncpa [#allocation9], 1
    %s432 = scalar_lea.sflag [#allocation9], 1
    %433 = vsyncpa %s432, 1
    %434 = vsyncpa [#allocation7], 1
    %s435 = scalar_lea.sflag [#allocation7], 1
    %436 = vsyncpa %s435, 1

</llo_original>
